<compile_context>
chip_gen: v6e
topology: v6e:2x2x1
jax: 0.10.0
libtpu: 0.0.40
codegen_flags: <defaults>
</compile_context>

<pallas_src>
import functools
import math

import jax
import jax.numpy as jnp
from jax import lax
from jax.experimental import pallas as pl
from jax.experimental.pallas import tpu as pltpu


def _round_up(x: int, m: int) -> int:
    return ((x + m - 1) // m) * m


def _pick_tile(dim: int, max_tile: int, align: int) -> int:
    """Largest multiple of `align` <= max_tile that evenly divides the
    align-rounded dim (-> no padding); falls back to the clamped max tile when
    only pathologically small divisors exist (padding beats grid overhead)."""
    dim_a = _round_up(dim, align)
    cap = min(max_tile, dim_a)
    best = align
    t = align
    while t <= cap:
        if dim_a % t == 0:
            best = t
        t += align
    if best * 4 < cap:  # only tiny divisors -> prefer padding to a big tile
        best = cap
    return best


# ---------------------------------------------------------------------------
# Kernels
# ---------------------------------------------------------------------------

def _linear_kernel_f32_out(x_ref, w_ref, b_ref, o_ref):
    # f32 output: the output block is resident across k (block index (i, j)),
    # so accumulate into it directly -> no scratch, no epilogue vreg copy.
    k = pl.program_id(2)

    @pl.when(k == 0)
    def _():
        o_ref[...] = jnp.zeros_like(o_ref)

    o_ref[...] += jnp.dot(x_ref[...], w_ref[...],
                          preferred_element_type=jnp.float32)

    @pl.when(k == pl.num_programs(2) - 1)
    def _():
        o_ref[...] += b_ref[...]


def _linear_kernel_lowp_out(x_ref, w_ref, b_ref, o_ref, acc_ref):
    # Low-precision output (e.g. bf16): keep an f32 VMEM accumulator resident
    # across k; bias-add + downcast only in the epilogue.
    k = pl.program_id(2)

    @pl.when(k == 0)
    def _():
        acc_ref[...] = jnp.zeros_like(acc_ref)

    acc_ref[...] += jnp.dot(x_ref[...], w_ref[...],
                            preferred_element_type=jnp.float32)

    @pl.when(k == pl.num_programs(2) - 1)
    def _():
        o_ref[...] = (acc_ref[...] + b_ref[...]).astype(o_ref.dtype)


# ---------------------------------------------------------------------------
# Parameter packing (one-time, amortized over every forward call)
# ---------------------------------------------------------------------------

def pack_linear_params(weight, bias=None, *, tn=512, tk=1024, compute_dtype=None):
    """Prepare nn.Linear params for the Pallas kernel.

    weight: (d_out, d_in) PyTorch layout.  Transposed to (d_in, d_out),
    optionally cast (e.g. bf16 for v5e/v6e) and zero-padded to the tile grid,
    so the per-call path never rewrites the static weight in HBM.
    """
    d_out, d_in = weight.shape
    tn_e = _pick_tile(d_out, tn, 128)
    tk_e = _pick_tile(d_in, tk, 128)
    np_ = _round_up(d_out, tn_e)
    kp = _round_up(d_in, tk_e)

    w = weight.T  # (d_in, d_out)
    if compute_dtype is not None:
        w = w.astype(compute_dtype)
    if (kp, np_) != (d_in, d_out):
        w = jnp.pad(w, ((0, kp - d_in), (0, np_ - d_out)))

    if bias is None:
        b = jnp.zeros((d_out,), jnp.float32)
    else:
        b = bias.astype(jnp.float32)
    if np_ != d_out:
        b = jnp.pad(b, (0, np_ - d_out))
    b = b.reshape(1, np_)

    return {"w": w, "b": b, "d_out": d_out, "tn_e": tn_e, "tk_e": tk_e}


# ---------------------------------------------------------------------------
# Forward
# ---------------------------------------------------------------------------

@functools.partial(jax.jit, static_argnames=("d_out", "tn_e", "tk_e", "tm"))
def _linear_forward_impl(x, w, b, *, d_out, tn_e, tk_e, tm):
    *lead, d_in = x.shape
    m = math.prod(lead) if lead else 1
    kp, np_ = w.shape
    out_dtype = x.dtype
    out_itemsize = jnp.dtype(out_dtype).itemsize

    # Sub-32-bit outputs pack along sublanes -> keep the M tile a multiple of
    # the packed sublane group (8 for f32, 16 for bf16, 32 for int8/fp8).
    align_m = max(8, 32 // out_itemsize)
    tm_e = _pick_tile(m, tm, align_m)
    mp = _round_up(m, tm_e)

    x2d = x.reshape(m, d_in).astype(w.dtype)  # bf16 compute path casts here
    if (mp, kp) != (m, d_in):
        x2d = jnp.pad(x2d, ((0, mp - m), (0, kp - d_in)))

    grid = (mp // tm_e, np_ // tn_e, kp // tk_e)

    op_item = jnp.dtype(w.dtype).itemsize
    cost = pl.CostEstimate(
        flops=2 * m * d_in * d_out,
        transcendentals=0,
        bytes_accessed=(op_item * grid[1] * mp * kp      # x re-read per N tile
                        + op_item * grid[0] * np_ * kp   # W re-read per M tile
                        + 4 * np_                        # bias
                        + out_itemsize * mp * np_),      # output
    )

    if out_dtype == jnp.float32:
        kernel = _linear_kernel_f32_out
        scratch_shapes = []
    else:
        kernel = _linear_kernel_lowp_out
        scratch_shapes = [pltpu.VMEM((tm_e, tn_e), jnp.float32)]

    out = pl.pallas_call(
        kernel,
        out_shape=jax.ShapeDtypeStruct((mp, np_), out_dtype),
        grid_spec=pltpu.PrefetchScalarGridSpec(
            num_scalar_prefetch=0,
            grid=grid,
            in_specs=[
                pl.BlockSpec((tm_e, tk_e), lambda i, j, k: (i, k)),   # x
                pl.BlockSpec((tk_e, tn_e), lambda i, j, k: (k, j)),   # W (d_in, d_out)
                pl.BlockSpec((1, tn_e), lambda i, j, k: (0, j)),      # bias
            ],
            out_specs=pl.BlockSpec((tm_e, tn_e), lambda i, j, k: (i, j)),
            scratch_shapes=scratch_shapes,
        ),
        compiler_params=pltpu.CompilerParams(
            # TODO(synk): on v7x, verify the two TensorCores split the M axis;
            # if not, switch the M axis to pltpu.CORE_PARALLEL.
            dimension_semantics=("parallel", "parallel", "arbitrary"),
            vmem_limit_bytes=48 * 1024 * 1024,
        ),
        cost_estimate=cost,
    )(x2d, w, b)

    out = out[:m, :d_out]
    return out.reshape(*lead, d_out)


def linear_forward(x, packed, *, tm=512):
    """x: (..., d_in), packed = pack_linear_params(weight, bias) -> (..., d_out)."""
    return _linear_forward_impl(
        x, packed["w"], packed["b"],
        d_out=packed["d_out"], tn_e=packed["tn_e"], tk_e=packed["tk_e"], tm=tm)


def init_linear_params(key, d_in, d_out, bias=True, dtype=jnp.float32):
    """Matches nn.Linear shapes; weight uses xavier_normal_ like the module."""
    kw, kb = jax.random.split(key)
    std = (2.0 / (d_in + d_out)) ** 0.5                 # xavier normal
    weight = std * jax.random.normal(kw, (d_out, d_in), dtype=dtype)
    if bias:
        bound = 1.0 / (d_in ** 0.5)                     # PyTorch default bias init
        b = jax.random.uniform(kb, (d_out,), dtype=dtype,
                               minval=-bound, maxval=bound)
    else:
        b = jnp.zeros((d_out,), dtype=dtype)
    return weight, b


if __name__ == "__main__":
    key = jax.random.PRNGKey(0)
    k_x, k_p, k_x2, k_p2 = jax.random.split(key, 4)

    # --- Small shape consistent with the module usage (f32 path) ------------
    batch, seq, d_in, d_out = 2, 8, 32, 32
    x = jax.random.normal(k_x, (batch, seq, d_in), dtype=jnp.float32)
    weight, bias = init_linear_params(k_p, d_in, d_out, bias=True)

    packed = pack_linear_params(weight, bias)
    y = jax.block_until_ready(linear_forward(x, packed))

    y_ref = x @ weight.T + bias
    assert y.shape == (batch, seq, d_out)
    assert jnp.allclose(y, y_ref, atol=1e-5, rtol=1e-5)

    # --- Larger ragged shape: exercises divisor-friendly tiling (640 -> 128) -
    b2, s2, d_in2, d_out2 = 4, 128, 1024, 640
    x2 = jax.random.normal(k_x2, (b2, s2, d_in2), dtype=jnp.float32)
    w2, bia2 = init_linear_params(k_p2, d_in2, d_out2, bias=True)

    packed2 = pack_linear_params(w2, bia2)
    y2 = jax.block_until_ready(linear_forward(x2, packed2))
    y2_ref = (
        jnp.einsum("bsi,oi->bso", x2, w2, precision=lax.Precision.HIGHEST)
        + bia2
    )
    assert y2.shape == (b2, s2, d_out2)
    assert jnp.allclose(y2, y2_ref, atol=1e-3, rtol=1e-3)

    # --- bf16 compute path (bf16 operands, f32 accumulation, bf16 output) ---
    packed_bf16 = pack_linear_params(weight, bias, compute_dtype=jnp.bfloat16)
    y3 = jax.block_until_ready(
        linear_forward(x.astype(jnp.bfloat16), packed_bf16))
    assert y3.dtype == jnp.bfloat16
    assert jnp.allclose(y3.astype(jnp.float32), y_ref, atol=2e-2, rtol=2e-2)

    print("KERNEL_OK")
</pallas_src>

<mosaic_0001>
module attributes {stable_mosaic.version = 11 : i64} {
  func.func @_linear_kernel_f32_out(%arg0: i32, %arg1: i32, %arg2: i32, %arg3: memref<16x128xf32, #tpu.memory_space<vmem>>, %arg4: memref<128x128xf32, #tpu.memory_space<vmem>>, %arg5: memref<1x128xf32, #tpu.memory_space<vmem>>, %arg6: memref<16x128xf32, #tpu.memory_space<vmem>>) attributes {dimension_semantics = [#tpu.dimension_semantics<parallel>, #tpu.dimension_semantics<parallel>, #tpu.dimension_semantics<arbitrary>], iteration_bounds = array<i64: 1, 1, 1>, scalar_prefetch = 0 : i64, scratch_operands = 0 : i64, tpu.core_type = #tpu.core_type<tc>, window_params = [{transform_indices = @transform_0, window_bounds = array<i64: 16, 128>}, {transform_indices = @transform_1, window_bounds = array<i64: 128, 128>}, {transform_indices = @transform_2, window_bounds = array<i64: 1, 128>}, {transform_indices = @transform_3, window_bounds = array<i64: 16, 128>}]} {
    %c0_i32 = arith.constant 0 : i32
    %0 = arith.cmpi eq, %arg2, %c0_i32 : i32
    %1 = arith.extui %0 : i1 to i32
    %c0_i32_0 = arith.constant 0 : i32
    %2 = arith.cmpi ne, %1, %c0_i32_0 : i32
    scf.if %2 {
      %cst_10 = arith.constant 0.000000e+00 : f32
      %12 = vector.broadcast %cst_10 : f32 to vector<16x128xf32>
      %c0_11 = arith.constant 0 : index
      %c0_12 = arith.constant 0 : index
      %13 = vector.load %arg6[%c0_11, %c0_12] : memref<16x128xf32, #tpu.memory_space<vmem>>, vector<16x128xf32>
      tpu.vector_store %arg6[%c0_11, %c0_12], %12 {strides = array<i32>} : memref<16x128xf32, #tpu.memory_space<vmem>>, vector<16x128xf32>,
    } else {
    }
    %c0 = arith.constant 0 : index
    %c0_1 = arith.constant 0 : index
    %3 = vector.load %arg6[%c0, %c0_1] : memref<16x128xf32, #tpu.memory_space<vmem>>, vector<16x128xf32>
    %c0_2 = arith.constant 0 : index
    %c0_3 = arith.constant 0 : index
    %4 = vector.load %arg3[%c0_2, %c0_3] : memref<16x128xf32, #tpu.memory_space<vmem>>, vector<16x128xf32>
    %c0_4 = arith.constant 0 : index
    %c0_5 = arith.constant 0 : index
    %5 = vector.load %arg4[%c0_4, %c0_5] : memref<128x128xf32, #tpu.memory_space<vmem>>, vector<128x128xf32>
    %cst = arith.constant dense<0.000000e+00> : vector<16x128xf32>
    %6 = tpu.matmul %4, %5, %cst {dimension_numbers = #tpu.dot_dimension_numbers<[1], [0], [0], [1], [0, 0, 1, 1], [], []>} : vector<16x128xf32>, vector<128x128xf32>, vector<16x128xf32> -> vector<16x128xf32>
    %7 = arith.addf %3, %6 : vector<16x128xf32>
    %c0_6 = arith.constant 0 : index
    %c0_7 = arith.constant 0 : index
    %8 = vector.load %arg6[%c0_6, %c0_7] : memref<16x128xf32, #tpu.memory_space<vmem>>, vector<16x128xf32>
    tpu.vector_store %arg6[%c0_6, %c0_7], %7 {strides = array<i32>} : memref<16x128xf32, #tpu.memory_space<vmem>>, vector<16x128xf32>,
    %c0_i32_8 = arith.constant 0 : i32
    %9 = arith.cmpi eq, %arg2, %c0_i32_8 : i32
    %10 = arith.extui %9 : i1 to i32
    %c0_i32_9 = arith.constant 0 : i32
    %11 = arith.cmpi ne, %10, %c0_i32_9 : i32
    scf.if %11 {
      %c0_10 = arith.constant 0 : index
      %c0_11 = arith.constant 0 : index
      %12 = vector.load %arg6[%c0_10, %c0_11] : memref<16x128xf32, #tpu.memory_space<vmem>>, vector<16x128xf32>
      %c0_12 = arith.constant 0 : index
      %c0_13 = arith.constant 0 : index
      %13 = vector.load %arg5[%c0_12, %c0_13] : memref<1x128xf32, #tpu.memory_space<vmem>>, vector<1x128xf32>
      %14 = vector.broadcast %13 : vector<1x128xf32> to vector<16x128xf32>
      %15 = arith.addf %12, %14 : vector<16x128xf32>
      %c0_14 = arith.constant 0 : index
      %c0_15 = arith.constant 0 : index
      %16 = vector.load %arg6[%c0_14, %c0_15] : memref<16x128xf32, #tpu.memory_space<vmem>>, vector<16x128xf32>
      tpu.vector_store %arg6[%c0_14, %c0_15], %15 {strides = array<i32>} : memref<16x128xf32, #tpu.memory_space<vmem>>, vector<16x128xf32>,
    } else {
    }
    return
  }
  func.func @transform_0(%arg0: i32, %arg1: i32, %arg2: i32) -> (i32, i32) {
    %c0_i32 = arith.constant 0 : i32
    return %arg0, %arg2 : i32, i32
  }
  func.func @transform_1(%arg0: i32, %arg1: i32, %arg2: i32) -> (i32, i32) {
    %c0_i32 = arith.constant 0 : i32
    return %arg2, %arg1 : i32, i32
  }
  func.func @transform_2(%arg0: i32, %arg1: i32, %arg2: i32) -> (i32, i32) {
    %c0_i32 = arith.constant 0 : i32
    %c0_i32_0 = arith.constant 0 : i32
    return %c0_i32, %arg1 : i32, i32
  }
  func.func @transform_3(%arg0: i32, %arg1: i32, %arg2: i32) -> (i32, i32) {
    %c0_i32 = arith.constant 0 : i32
    return %arg0, %arg1 : i32, i32
  }
}

</mosaic_0001>

<llo_original>
// kernel: _linear_forward_impl.1
$region0: #{_linear_forward_impl.1}
  #allocation0 [shape = 'u32[]', space=smem, size = 0x4, offset = 0x4, fixed_abs, tag = 'smem constant byte address 0x4 - core index']
  #allocation1 [shape = 'u32[144,128]{1,0:T(1,128)}', space=vmem, size = 0x12000, scoped, tag = 'internal scratch']
  %s0 = inlined_call_operand.vmem [shape: f32[16,128], index: 0, kind: input, shape index: {}]
  %s1 = inlined_call_operand.hbm [shape: f32[128,128], index: 1, kind: input, shape index: {}]
  %s2 = inlined_call_operand.vmem [shape: f32[1,128], index: 2, kind: input, shape index: {}]
  %s3 = inlined_call_operand.vmem [shape: f32[16,128], index: 3, kind: output, shape index: {}]
  %s4 = sld [smem:[#allocation0]]
  $region34: #{_linear_forward_impl.1} parent=0
    _
  %s6 = ssub.s32 1, %s4
  %s7 = scalar_select 0, %s6, %s4
  $region1: #{_linear_forward_impl.1} parent=0
    #allocation2 [shape = 'u8[65536]{0}', space=vmem, size = 0x10000, scoped, tag = 'input window, operand 1, single buffered']
    #allocation3 [shape = 's32[1]{0}', space=sflag, size = 0x4, scoped, tag = 'scoped memory for _linear_forward_impl.1']
    %8 = vsyncpa [#allocation3], 0
    // Predicated region
    $region2: #{_linear_forward_impl.1} parent=1 // pred_check
      _
    $region3: #{_linear_forward_impl.1} parent=1 // pred_check_branch
      %10 = sbr.rel (0) target = $region5
    $region4: #{_linear_forward_impl.1} parent=1 // pred_region
      _
    $region5: #{_linear_forward_impl.1} parent=1 // pred_fallthru
      _
    // Predicated region
    $region6: #{_linear_forward_impl.1} parent=1 // pred_check
      _
    $region7: #{_linear_forward_impl.1} parent=1 // pred_check_branch
      %12 = sbr.rel (0) target = $region9
    $region8: #{_linear_forward_impl.1} parent=1 // pred_region
      %s14 = ssub.s32 2048, 2048
      %15 = vsyncadd [#allocation3], %s14
      %s16 = sshll.u32 [#allocation2], 4
      %s17 = int_to_ptr.vmem [resolvable:$true] %s16
      %22 = dma.hbm_to_vmem [thread:$0]  %s1, 2048, %s17, [#allocation3], 128, 128, 8
    $region9: #{_linear_forward_impl.1} parent=1 // pred_fallthru
      _
    // Predicated region
    $region10: #{_linear_forward_impl.1} parent=1 // pred_check
      _
    $region11: #{_linear_forward_impl.1} parent=1 // pred_check_branch
      %24 = sbr.rel (0) target = $region13
    $region12: #{_linear_forward_impl.1} parent=1 // pred_region
      _
    $region13: #{_linear_forward_impl.1} parent=1 // pred_fallthru
      _
    // Predicated region
    $region14: #{_linear_forward_impl.1} parent=1 // pred_check
      _
    $region15: #{_linear_forward_impl.1} parent=1 // pred_check_branch
      %26 = sbr.rel (0) target = $region17
    $region16: #{_linear_forward_impl.1} parent=1 // pred_region
      %27 = dma.done [#allocation3], 2048
    $region17: #{_linear_forward_impl.1} parent=1 // pred_fallthru
      _
    %p28 = scmp.eq.s32.totalorder 0, 0
    // Predicated region
    $region18: #{_linear_forward_impl.1} parent=1 // pred_check
      %p29 = pneg %p28
    $region19: #{_linear_forward_impl.1} parent=1 // pred_check_branch
      %31 = sbr.rel (%p29) target = $region21
    $region20: #{_linear_forward_impl.1} parent=1 // pred_region
      %32 = vst [vmem:[%s3] sm:$0xff] 0.0
      %33 = vst [vmem:[%s3 + $0x8] sm:$0xff] 0.0
    $region21: #{_linear_forward_impl.1} parent=1 // pred_fallthru
      _
    %v34 = vld [vmem:[%s3] sm:$0xff]
    %v35 = vld [vmem:[%s3 + $0x8] sm:$0xff]
    %v36 = vld [vmem:[%s0] sm:$0xff]
    %v37 = vld [vmem:[%s0 + $0x8] sm:$0xff]
    %v38 = vld [vmem:[#allocation2] sm:$0xff]
    %v39 = vld [vmem:[#allocation2 + $0x8] sm:$0xff]
    %v40 = vld [vmem:[#allocation2 + $0x10] sm:$0xff]
    %v41 = vld [vmem:[#allocation2 + $0x18] sm:$0xff]
    %v42 = vld [vmem:[#allocation2 + $0x20] sm:$0xff]
    %v43 = vld [vmem:[#allocation2 + $0x28] sm:$0xff]
    %v44 = vld [vmem:[#allocation2 + $0x30] sm:$0xff]
    %v45 = vld [vmem:[#allocation2 + $0x38] sm:$0xff]
    %v46 = vld [vmem:[#allocation2 + $0x40] sm:$0xff]
    %v47 = vld [vmem:[#allocation2 + $0x48] sm:$0xff]
    %v48 = vld [vmem:[#allocation2 + $0x50] sm:$0xff]
    %v49 = vld [vmem:[#allocation2 + $0x58] sm:$0xff]
    %v50 = vld [vmem:[#allocation2 + $0x60] sm:$0xff]
    %v51 = vld [vmem:[#allocation2 + $0x68] sm:$0xff]
    %v52 = vld [vmem:[#allocation2 + $0x70] sm:$0xff]
    %v53 = vld [vmem:[#allocation2 + $0x78] sm:$0xff]
    %54 = vmatprep.subr.mxu0 0.0
    %55 = vmatpush1.msra.mxu0 %v53
    %56 = vmatprep.subr.mxu0 0.0
    %57 = vmatpush1.msra.mxu0 %v52
    %58 = vmatprep.subr.mxu0 0.0
    %59 = vmatpush1.msra.mxu0 %v51
    %60 = vmatprep.subr.mxu0 0.0
    %61 = vmatpush1.msra.mxu0 %v50
    %62 = vmatprep.subr.mxu0 0.0
    %63 = vmatpush1.msra.mxu0 %v49
    %64 = vmatprep.subr.mxu0 0.0
    %65 = vmatpush1.msra.mxu0 %v48
    %66 = vmatprep.subr.mxu0 0.0
    %67 = vmatpush1.msra.mxu0 %v47
    %68 = vmatprep.subr.mxu0 0.0
    %69 = vmatpush1.msra.mxu0 %v46
    %70 = vmatprep.subr.mxu0 0.0
    %71 = vmatpush1.msra.mxu0 %v45
    %72 = vmatprep.subr.mxu0 0.0
    %73 = vmatpush1.msra.mxu0 %v44
    %74 = vmatprep.subr.mxu0 0.0
    %75 = vmatpush1.msra.mxu0 %v43
    %76 = vmatprep.subr.mxu0 0.0
    %77 = vmatpush1.msra.mxu0 %v42
    %78 = vmatprep.subr.mxu0 0.0
    %79 = vmatpush1.msra.mxu0 %v41
    %80 = vmatprep.subr.mxu0 0.0
    %81 = vmatpush1.msra.mxu0 %v40
    %82 = vmatprep.subr.mxu0 0.0
    %83 = vmatpush1.msra.mxu0 %v39
    %84 = vmatprep.subr.mxu0 0.0
    %85 = vmatpush1.msra.mxu0 %v38
    %86 = vmatprep.subr.mxu0 0.0
    %87 = vmatpush2.msra.mxu0 0.0
    %88 = vmatprep.subr.mxu0 0.0
    %89 = vmatpush2.msra.mxu0 0.0
    %90 = vmatprep.subr.mxu0 0.0
    %91 = vmatpush2.msra.mxu0 0.0
    %92 = vmatprep.subr.mxu0 0.0
    %93 = vmatpush2.msra.mxu0 0.0
    %94 = vmatprep.subr.mxu0 0.0
    %95 = vmatpush2.msra.mxu0 0.0
    %96 = vmatprep.subr.mxu0 0.0
    %97 = vmatpush2.msra.mxu0 0.0
    %98 = vmatprep.subr.mxu0 0.0
    %99 = vmatpush2.msra.mxu0 0.0
    %100 = vmatprep.subr.mxu0 0.0
    %101 = vmatpush2.msra.mxu0 0.0
    %102 = vmatprep.subr.mxu0 0.0
    %103 = vmatpush2.msra.mxu0 0.0
    %104 = vmatprep.subr.mxu0 0.0
    %105 = vmatpush2.msra.mxu0 0.0
    %106 = vmatprep.subr.mxu0 0.0
    %107 = vmatpush2.msra.mxu0 0.0
    %108 = vmatprep.subr.mxu0 0.0
    %109 = vmatpush2.msra.mxu0 0.0
    %110 = vmatprep.subr.mxu0 0.0
    %111 = vmatpush2.msra.mxu0 0.0
    %112 = vmatprep.subr.mxu0 0.0
    %113 = vmatpush2.msra.mxu0 0.0
    %114 = vmatprep.subr.mxu0 0.0
    %115 = vmatpush2.msra.mxu0 0.0
    %116 = vmatprep.subr.mxu0 0.0
    %117 = vmatpush2.msra.mxu0 0.0
    %118 = vmatprep.mubr.f32.mxu0 0.0
    %119 = vmatmul.mubr.f32.gmra.mxu0 %v36
    %v120 = vpop.f32.mrf.mxu0
    %v121 = vadd.f32 0.0, %v120
    %v122 = vpop.f32.mrf.mxu0
    %123 = vmatprep.mubr.f32.mxu0 0.0
    %124 = vmatmul.mubr.f32.gmra.mxu0 %v37
    %v125 = vpop.f32.mrf.mxu0
    %v126 = vadd.f32 0.0, %v125
    %v127 = vpop.f32.mrf.mxu0
    %128 = vdwg.mxu0
    %v129 = vadd.f32 %v34, %v121
    %v130 = vadd.f32 %v35, %v126
    %131 = vst [vmem:[%s3] sm:$0xff] %v129
    %132 = vst [vmem:[%s3 + $0x8] sm:$0xff] %v130
    // Predicated region
    $region22: #{_linear_forward_impl.1} parent=1 // pred_check
      %p133 = pneg %p28
    $region23: #{_linear_forward_impl.1} parent=1 // pred_check_branch
      %135 = sbr.rel (%p133) target = $region25
    $region24: #{_linear_forward_impl.1} parent=1 // pred_region
      %v136 = vld [vmem:[%s3] sm:$0xff]
      %v137 = vld [vmem:[%s3 + $0x8] sm:$0xff]
      %v138 = vld [vmem:[%s2] sm:$0x1]
      %v140 = vlaneseq
      %v141 = vshrl.u32 %v140, 7
      %v142 = vsub.s32 0, %v141
      %v143 = vrot.slane %v138, %v142
      %v145 = vadd.f32 %v136, %v143
      %v146 = vadd.f32 %v137, %v143
      %147 = vst [vmem:[%s3] sm:$0xff] %v145
      %148 = vst [vmem:[%s3 + $0x8] sm:$0xff] %v146
    $region25: #{_linear_forward_impl.1} parent=1 // pred_fallthru
      _
    // Predicated region
    $region26: #{_linear_forward_impl.1} parent=1 // pred_check
      _
    $region27: #{_linear_forward_impl.1} parent=1 // pred_check_branch
      %150 = sbr.rel (0) target = $region29
    $region28: #{_linear_forward_impl.1} parent=1 // pred_region
      _
    $region29: #{_linear_forward_impl.1} parent=1 // pred_fallthru
      _
    // Predicated region
    $region30: #{_linear_forward_impl.1} parent=1 // pred_check
      _
    $region31: #{_linear_forward_impl.1} parent=1 // pred_check_branch
      %152 = sbr.rel (0) target = $region33
    $region32: #{_linear_forward_impl.1} parent=1 // pred_region
      _
    $region33: #{_linear_forward_impl.1} parent=1 // pred_fallthru
      _
    %153 = vsyncpa [#allocation3], 1

</llo_original>
